<compile_context>
chip_gen: v7x
topology: tpu7x:2x2x1
jax: 0.10.0
libtpu: 0.0.40
codegen_flags: <defaults>
</compile_context>

<pallas_src>
import functools

import jax
import jax.numpy as jnp
from jax.experimental import pallas as pl
from jax.experimental.pallas import tpu as pltpu


def _round_up(n, m):
    return ((n + m - 1) // m) * m


def _mlp_kernel(x_ref, w1_ref, b1_ref, w2_ref, b2_ref, o_ref):
    # fc1 on the MXU: bf16 inputs, f32 accumulate.
    x_bf = x_ref[...].astype(jnp.bfloat16)
    h = jnp.dot(x_bf, w1_ref[...], preferred_element_type=jnp.float32)
    h = h + b1_ref[...]                 # (1, H) -> implicit broadcast over rows
    h = jnp.maximum(h, 0.0)             # ReLU on the VPU, f32

    # fc2 has a single output column: use VPU mul + lane reduction instead of
    # wasting a full MXU push/pop on a (TB,128)x(128,1) matmul.
    z = jnp.sum(h * w2_ref[...], axis=-1, keepdims=True)   # (TB, 1)
    z = z + b2_ref[0, 0]
    o_ref[...] = jax.nn.sigmoid(z).astype(o_ref.dtype)


@functools.partial(jax.jit, static_argnames=("tb",))
def nn_model_forward(x, w1, b1, w2, b2, *, tb=512):
    """x: (B, D) f32 -> (B, 1) f32.  Batch-tiled, pipelined Pallas kernel."""
    B, D = x.shape
    H = w1.shape[1]          # 128
    O = w2.shape[1]          # 1

    # Batch tile: multiple of 8 (sublane constraint), MXU-friendly (>=256 when
    # possible via the 512 default), clamped so tiny batches still work.
    TB = min(tb, _round_up(B, 8))
    grid = (pl.cdiv(B, TB),)

    # Weights/biases are small and VMEM-resident (constant index_map).
    w1_bf = w1.astype(jnp.bfloat16)                  # bf16 operand for the MXU
    b1_2d = b1.reshape(1, H).astype(jnp.float32)
    w2_row = w2.reshape(1, H).astype(jnp.float32)    # (128,1) -> (1,128) row
    b2_2d = b2.reshape(1, O).astype(jnp.float32)

    cost = pl.CostEstimate(
        flops=2 * B * D * H + 3 * B * H + B,
        transcendentals=B,                            # sigmoid
        bytes_accessed=4 * B * D + 2 * D * H + 8 * H + 4 * B + 4,
    )

    return pl.pallas_call(
        _mlp_kernel,
        out_shape=jax.ShapeDtypeStruct((B, O), jnp.float32),
        grid_spec=pl.GridSpec(
            grid=grid,
            in_specs=[
                pl.BlockSpec((TB, D), lambda i: (i, 0)),   # x: tiled over batch
                pl.BlockSpec((D, H), lambda i: (0, 0)),    # W1: resident
                pl.BlockSpec((1, H), lambda i: (0, 0)),    # b1: resident
                pl.BlockSpec((1, H), lambda i: (0, 0)),    # W2 row: resident
                pl.BlockSpec((1, O), lambda i: (0, 0)),    # b2: resident
            ],
            out_specs=pl.BlockSpec((TB, O), lambda i: (i, 0)),
        ),
        compiler_params=pltpu.CompilerParams(
            dimension_semantics=("parallel",)),            # megacore on v7x
        cost_estimate=cost,
    )(x, w1_bf, b1_2d, w2_row, b2_2d)


def init_params(key, input_dim, hidden=128, out=1):
    """Deterministic init mirroring PyTorch nn.Linear default
    (U[-1/sqrt(fan_in), +1/sqrt(fan_in)])."""
    k1, k2, k3, k4 = jax.random.split(key, 4)
    lim1 = 1.0 / jnp.sqrt(jnp.float32(input_dim))
    lim2 = 1.0 / jnp.sqrt(jnp.float32(hidden))
    w1 = jax.random.uniform(k1, (input_dim, hidden), jnp.float32, -lim1, lim1)
    b1 = jax.random.uniform(k2, (hidden,), jnp.float32, -lim1, lim1)
    w2 = jax.random.uniform(k3, (hidden, out), jnp.float32, -lim2, lim2)
    b2 = jax.random.uniform(k4, (out,), jnp.float32, -lim2, lim2)
    return w1, b1, w2, b2


def _reference(x, w1, b1, w2, b2):
    return jax.nn.sigmoid(jnp.maximum(x @ w1 + b1, 0.0) @ w2 + b2)


if __name__ == "__main__":
    key = jax.random.PRNGKey(0)
    kx, kp, kx2, kp2 = jax.random.split(key, 4)

    # Small demo shape matching the module (fc1: input_dim -> 128, fc2: 128 -> 1).
    batch, input_dim = 8, 32
    x = jax.random.normal(kx, (batch, input_dim), jnp.float32)
    w1, b1, w2, b2 = init_params(kp, input_dim)

    y = nn_model_forward(x, w1, b1, w2, b2)
    y = jax.block_until_ready(y)

    ref = _reference(x, w1, b1, w2, b2)
    assert y.shape == (batch, 1)
    # bf16 MXU inputs (f32 accumulate) -> slightly looser tolerance than pure f32.
    assert jnp.allclose(y, ref, atol=2e-2, rtol=2e-2), "small-shape mismatch"

    # Exercise the multi-tile + partial-last-block path (B not a multiple of TB).
    batch2, input_dim2 = 520, 64
    x2 = jax.random.normal(kx2, (batch2, input_dim2), jnp.float32)
    w1b, b1b, w2b, b2b = init_params(kp2, input_dim2)
    y2 = jax.block_until_ready(nn_model_forward(x2, w1b, b1b, w2b, b2b))
    ref2 = _reference(x2, w1b, b1b, w2b, b2b)
    assert y2.shape == (batch2, 1)
    assert jnp.allclose(y2, ref2, atol=2e-2, rtol=2e-2), "tiled-shape mismatch"

    print("KERNEL_OK")
</pallas_src>

<mosaic_0001>
module attributes {stable_mosaic.version = 11 : i64} {
  func.func @_mlp_kernel(%arg0: i32, %arg1: memref<8x32xf32, #tpu.memory_space<vmem>>, %arg2: memref<32x128xbf16, #tpu.memory_space<vmem>>, %arg3: memref<1x128xf32, #tpu.memory_space<vmem>>, %arg4: memref<1x128xf32, #tpu.memory_space<vmem>>, %arg5: memref<1x1xf32, #tpu.memory_space<vmem>>, %arg6: memref<8x1xf32, #tpu.memory_space<vmem>>) attributes {dimension_semantics = [#tpu.dimension_semantics<parallel>], iteration_bounds = array<i64: 1>, scalar_prefetch = 0 : i64, scratch_operands = 0 : i64, tpu.core_type = #tpu.core_type<tc>, window_params = [{transform_indices = @transform_0, window_bounds = array<i64: 8, 32>}, {pipeline_mode = #tpu.pipeline_mode<synchronous>, transform_indices = @transform_1, window_bounds = array<i64: 32, 128>}, {pipeline_mode = #tpu.pipeline_mode<synchronous>, transform_indices = @transform_2, window_bounds = array<i64: 1, 128>}, {pipeline_mode = #tpu.pipeline_mode<synchronous>, transform_indices = @transform_3, window_bounds = array<i64: 1, 128>}, {pipeline_mode = #tpu.pipeline_mode<synchronous>, transform_indices = @transform_4, window_bounds = array<i64: 1, 1>}, {transform_indices = @transform_5, window_bounds = array<i64: 8, 1>}]} {
    %c0 = arith.constant 0 : index
    %c0_0 = arith.constant 0 : index
    %0 = vector.load %arg1[%c0, %c0_0] : memref<8x32xf32, #tpu.memory_space<vmem>>, vector<8x32xf32>
    %1 = arith.truncf %0 : vector<8x32xf32> to vector<8x32xbf16>
    %c0_1 = arith.constant 0 : index
    %c0_2 = arith.constant 0 : index
    %2 = vector.load %arg2[%c0_1, %c0_2] : memref<32x128xbf16, #tpu.memory_space<vmem>>, vector<32x128xbf16>
    %cst = arith.constant dense<0.000000e+00> : vector<8x128xf32>
    %3 = tpu.matmul %1, %2, %cst {dimension_numbers = #tpu.dot_dimension_numbers<[1], [0], [0], [1], [0, 0, 1, 1], [], []>} : vector<8x32xbf16>, vector<32x128xbf16>, vector<8x128xf32> -> vector<8x128xf32>
    %c0_3 = arith.constant 0 : index
    %c0_4 = arith.constant 0 : index
    %4 = vector.load %arg3[%c0_3, %c0_4] : memref<1x128xf32, #tpu.memory_space<vmem>>, vector<1x128xf32>
    %5 = vector.broadcast %4 : vector<1x128xf32> to vector<8x128xf32>
    %6 = arith.addf %3, %5 : vector<8x128xf32>
    %cst_5 = arith.constant 0.000000e+00 : f32
    %7 = vector.broadcast %cst_5 : f32 to vector<8x128xf32>
    %8 = arith.maximumf %6, %7 : vector<8x128xf32>
    %c0_6 = arith.constant 0 : index
    %c0_7 = arith.constant 0 : index
    %9 = vector.load %arg4[%c0_6, %c0_7] : memref<1x128xf32, #tpu.memory_space<vmem>>, vector<1x128xf32>
    %10 = vector.broadcast %9 : vector<1x128xf32> to vector<8x128xf32>
    %11 = arith.mulf %8, %10 : vector<8x128xf32>
    %cst_8 = arith.constant dense<0.000000e+00> : vector<8xf32>
    %12 = vector.multi_reduction <add>, %11, %cst_8 [1] : vector<8x128xf32> to vector<8xf32>
    %13 = vector.shape_cast %12 : vector<8xf32> to vector<8x1xf32>
    %c0_9 = arith.constant 0 : index
    %c0_10 = arith.constant 0 : index
    %14 = vector.load %arg5[%c0_9, %c0_10] : memref<1x1xf32, #tpu.memory_space<vmem>>, vector<1x1xf32>
    %15 = vector.extract %14[0, 0] : f32 from vector<1x1xf32>
    %16 = vector.broadcast %15 : f32 to vector<8x1xf32>
    %17 = arith.addf %13, %16 : vector<8x1xf32>
    %18 = arith.negf %17 : vector<8x1xf32>
    %19 = math.exp %18 : vector<8x1xf32>
    %cst_11 = arith.constant 1.000000e+00 : f32
    %20 = vector.broadcast %cst_11 : f32 to vector<8x1xf32>
    %21 = arith.addf %20, %19 : vector<8x1xf32>
    %22 = arith.divf %20, %21 : vector<8x1xf32>
    %c0_12 = arith.constant 0 : index
    %c0_13 = arith.constant 0 : index
    %23 = vector.load %arg6[%c0_12, %c0_13] : memref<8x1xf32, #tpu.memory_space<vmem>>, vector<8x1xf32>
    tpu.vector_store %arg6[%c0_12, %c0_13], %22 {strides = array<i32>} : memref<8x1xf32, #tpu.memory_space<vmem>>, vector<8x1xf32>,
    return
  }
  func.func @transform_0(%arg0: i32) -> (i32, i32) {
    %c0_i32 = arith.constant 0 : i32
    %c0_i32_0 = arith.constant 0 : i32
    return %arg0, %c0_i32 : i32, i32
  }
  func.func @transform_1(%arg0: i32) -> (i32, i32) {
    %c0_i32 = arith.constant 0 : i32
    %c0_i32_0 = arith.constant 0 : i32
    %c0_i32_1 = arith.constant 0 : i32
    return %c0_i32, %c0_i32_0 : i32, i32
  }
  func.func @transform_2(%arg0: i32) -> (i32, i32) {
    %c0_i32 = arith.constant 0 : i32
    %c0_i32_0 = arith.constant 0 : i32
    %c0_i32_1 = arith.constant 0 : i32
    return %c0_i32, %c0_i32_0 : i32, i32
  }
  func.func @transform_3(%arg0: i32) -> (i32, i32) {
    %c0_i32 = arith.constant 0 : i32
    %c0_i32_0 = arith.constant 0 : i32
    %c0_i32_1 = arith.constant 0 : i32
    return %c0_i32, %c0_i32_0 : i32, i32
  }
  func.func @transform_4(%arg0: i32) -> (i32, i32) {
    %c0_i32 = arith.constant 0 : i32
    %c0_i32_0 = arith.constant 0 : i32
    %c0_i32_1 = arith.constant 0 : i32
    return %c0_i32, %c0_i32_0 : i32, i32
  }
  func.func @transform_5(%arg0: i32) -> (i32, i32) {
    %c0_i32 = arith.constant 0 : i32
    %c0_i32_0 = arith.constant 0 : i32
    return %arg0, %c0_i32 : i32, i32
  }
}

</mosaic_0001>

<llo_original>
// kernel: nn_model_forward.1
$region0: #{nn_model_forward.1}
  #allocation0 [shape = 'u32[]', space=smem, size = 0x4, offset = 0x4, fixed_abs, tag = 'smem constant byte address 0x4 - core index']
  #allocation1 [shape = 'u32[144,128]{1,0:T(1,128)}', space=vmem, size = 0x12000, scoped, tag = 'internal scratch']
  #allocation2 [shape = 'f32[1,1]{1,0:T(1,128)S(1)}', space=vmem, size = 0x200, scoped, tag = 'scoped memory for nn_model_forward.1']
  %s0 = inlined_call_operand.vmem [shape: f32[8,32], index: 0, kind: input, shape index: {}]
  %s1 = inlined_call_operand.vmem [shape: bf16[32,128], index: 1, kind: input, shape index: {}]
  %s2 = inlined_call_operand.vmem [shape: f32[1,128], index: 2, kind: input, shape index: {}]
  %s3 = inlined_call_operand.vmem [shape: f32[1,128], index: 3, kind: input, shape index: {}]
  %s4 = inlined_call_operand.<no memory space> [shape: f32[1,1], index: 4, kind: input, shape index: {}]
  %s5 = inlined_call_operand.vmem [shape: f32[8,1], index: 5, kind: output, shape index: {}]
  %s6 = sld [smem:[#allocation0]]
  $region30: #{nn_model_forward.1} parent=0
    _
  %s8 = ssub.s32 1, %s6
  %s9 = scalar_select 0, %s8, %s6
  %v10 = vstv %s4
  %11 = vst [vmem:[#allocation2] sm:$0x1] %v10
  // Predicated region
  $region2: #{nn_model_forward.1} parent=0 // pred_check
    _
  $region3: #{nn_model_forward.1} parent=0 // pred_check_branch
    %13 = sbr.rel (0) target = $region5
  $region4: #{nn_model_forward.1} parent=0 // pred_region
    _
  $region5: #{nn_model_forward.1} parent=0 // pred_fallthru
    _
  // Predicated region
  $region6: #{nn_model_forward.1} parent=0 // pred_check
    _
  $region7: #{nn_model_forward.1} parent=0 // pred_check_branch
    %15 = sbr.rel (0) target = $region9
  $region8: #{nn_model_forward.1} parent=0 // pred_region
    _
  $region9: #{nn_model_forward.1} parent=0 // pred_fallthru
    _
  // Predicated region
  $region10: #{nn_model_forward.1} parent=0 // pred_check
    _
  $region11: #{nn_model_forward.1} parent=0 // pred_check_branch
    %17 = sbr.rel (0) target = $region13
  $region12: #{nn_model_forward.1} parent=0 // pred_region
    _
  $region13: #{nn_model_forward.1} parent=0 // pred_fallthru
    _
  // Predicated region
  $region14: #{nn_model_forward.1} parent=0 // pred_check
    _
  $region15: #{nn_model_forward.1} parent=0 // pred_check_branch
    %19 = sbr.rel (0) target = $region17
  $region16: #{nn_model_forward.1} parent=0 // pred_region
    _
  $region17: #{nn_model_forward.1} parent=0 // pred_fallthru
    _
  // Predicated region
  $region18: #{nn_model_forward.1} parent=0 // pred_check
    _
  $region19: #{nn_model_forward.1} parent=0 // pred_check_branch
    %21 = sbr.rel (0) target = $region21
  $region20: #{nn_model_forward.1} parent=0 // pred_region
    _
  $region21: #{nn_model_forward.1} parent=0 // pred_fallthru
    _
  %v23 = vld [vmem:[%s0] sm:$0xff]
  %v24 = vpack.c.bf16 %v23, %v23
  %v25 = vld [vmem:[%s1] sm:$0xf]
  %v26 = vld [vmem:[%s1 + $0x4] sm:$0xf]
  %v27 = vld [vmem:[%s1 + $0x8] sm:$0xf]
  %v28 = vld [vmem:[%s1 + $0xc] sm:$0xf]
  %v29 = vld [vmem:[%s2] sm:$0x1]
  %v31 = vlaneseq
  %v32 = vshrl.u32 %v31, 7
  %v33 = vsub.s32 0, %v32
  %v34 = vrot.slane %v29, %v33
  %v40 = vunpack.c.l.b16 %v25
  %v41 = vunpack.c.l.b16 %v26
  %v42 = vunpack.c.l.b16 %v27
  %v43 = vunpack.c.l.b16 %v28
  %v44 = vpack.c.b16 %v41, %v40
  %v45 = vpack.c.b16 %v43, %v42
  %vm48 = vcmask 261120
  %v50 = vsel %vm48, %v24, 0
  %52 = vmatprep.subr.bf16.mxu0 0
  %53 = vmatpush1.bf16.msra.mxu0 %v44
  %54 = vmatprep.subr.bf16.mxu0 0
  %55 = vmatpush1.bf16.msra.mxu0 %v45
  %56 = vmatprep.subr.bf16.mxu0 0
  %57 = vmatpush1.bf16.msra.mxu0 0
  %58 = vmatprep.subr.bf16.mxu0 0
  %59 = vmatpush1.bf16.msra.mxu0 0
  %60 = vmatprep.subr.bf16.mxu0 0
  %61 = vmatpush1.bf16.msra.mxu0 0
  %62 = vmatprep.subr.bf16.mxu0 0
  %63 = vmatpush1.bf16.msra.mxu0 0
  %64 = vmatprep.subr.bf16.mxu0 0
  %65 = vmatpush1.bf16.msra.mxu0 0
  %66 = vmatprep.subr.bf16.mxu0 0
  %67 = vmatpush1.bf16.msra.mxu0 0
  %68 = vmatprep.subr.bf16.mxu0 0
  %69 = vmatpush1.bf16.msra.mxu0 0
  %70 = vmatprep.subr.bf16.mxu0 0
  %71 = vmatpush1.bf16.msra.mxu0 0
  %72 = vmatprep.subr.bf16.mxu0 0
  %73 = vmatpush1.bf16.msra.mxu0 0
  %74 = vmatprep.subr.bf16.mxu0 0
  %75 = vmatpush1.bf16.msra.mxu0 0
  %76 = vmatprep.subr.bf16.mxu0 0
  %77 = vmatpush1.bf16.msra.mxu0 0
  %78 = vmatprep.subr.bf16.mxu0 0
  %79 = vmatpush1.bf16.msra.mxu0 0
  %80 = vmatprep.subr.bf16.mxu0 0
  %81 = vmatpush1.bf16.msra.mxu0 0
  %82 = vmatprep.subr.bf16.mxu0 0
  %83 = vmatpush1.bf16.msra.mxu0 0
  %84 = vmatprep.mubr.bf16.mxu0 0
  %85 = vmatmul.mubr.bf16.gmra.mrb[0].mxu0 %v50
  %v86 = vpop.f32.mrb[0].mxu0
  %v87 = vadd.f32 %v34, %v86
  %v88 = vpop.f32.mrb[0].mxu0
  %v89 = vpop.f32.mrb[0].mxu0
  %v90 = vpop.f32.mrb[0].mxu0
  %91 = vdwg.mxu0
  %v92 = vmax.f32 %v87, 0.0
  %v93 = vld [vmem:[%s3] sm:$0x1]
  %v95 = vlaneseq
  %v96 = vshrl.u32 %v95, 7
  %v97 = vsub.s32 0, %v96
  %v98 = vrot.slane %v93, %v97
  %v100 = vmul.f32 %v92, %v98
  %101 = vadd.xlane.f32.xlu0 %v100
  %v102 = vpop.xlane.xlu0 %101
  %v103 = vld [vmem:[#allocation2] sm:$0x1]
  %s104 = vtos %v103
  %v105 = vstv %s104
  %v106 = vadd.f32 %v102, %v105
  %v107 = vxor.u32 %v106, 2147483648
  %v108 = vmul.f32 %v107, 1.442695
  %v109 = vpow.pop %v108
  %v110 = vadd.f32 %v109, 1.0
  %v111 = vrcp.pop %v110
  %v112 = vmul.f32 1.0, %v111
  %vm113 = vcmask 7168
  %114 = vst.msk [vmem:[%s5] sm:$0xff] %vm113, %v112
  // Predicated region
  $region22: #{nn_model_forward.1} parent=0 // pred_check
    _
  $region23: #{nn_model_forward.1} parent=0 // pred_check_branch
    %116 = sbr.rel (0) target = $region25
  $region24: #{nn_model_forward.1} parent=0 // pred_region
    _
  $region25: #{nn_model_forward.1} parent=0 // pred_fallthru
    _
  // Predicated region
  $region26: #{nn_model_forward.1} parent=0 // pred_check
    _
  $region27: #{nn_model_forward.1} parent=0 // pred_check_branch
    %118 = sbr.rel (0) target = $region29
  $region28: #{nn_model_forward.1} parent=0 // pred_region
    _
  $region29: #{nn_model_forward.1} parent=0 // pred_fallthru
    _

</llo_original>
